<compile_context>
chip_gen: v6e
topology: v6e:2x2x1
jax: 0.10.0
libtpu: 0.0.40
codegen_flags: <defaults>
</compile_context>

<pallas_src>
import functools
import math

import numpy as np
import jax
import jax.numpy as jnp
from jax.experimental import pallas as pl
from jax.experimental.pallas import tpu as pltpu


def _round_up(x, m):
    return (x + m - 1) // m * m


_VMEM_LIMIT = 64 * 1024 * 1024  # lift the default scoped-VMEM cap (16/32 MiB)


# ------------------------------------------------------------------ kernels --

def _istft_frames_kernel(ang_ref, spec2_ref, dinv_ref, win_ref, out_ref):
    # X = angles * |spec| (f32), cast to the MXU dtype, single fused iDFT matmul.
    x = (ang_ref[...] * spec2_ref[...]).astype(dinv_ref.dtype)
    frames = jnp.dot(x, dinv_ref[...], preferred_element_type=jnp.float32)
    out_ref[...] = frames * win_ref[...]                 # synthesis window


def _stft_update_kernel(frames_ref, win_ref, dfwd_ref, tprev_ref,
                        reb_ref, ang_ref, *, momentum, f_pad):
    # analysis window + fused forward DFT -> [Sr | Si] on the lanes (one matmul)
    xw = (frames_ref[...] * win_ref[...]).astype(dfwd_ref.dtype)
    s = jnp.dot(xw, dfwd_ref[...], preferred_element_type=jnp.float32)
    reb_ref[...] = s
    # Griffin-Lim fast update: angles = rebuilt - momentum * tprev, unit magnitude
    a = s - momentum * tprev_ref[...]
    ar = a[:, :f_pad]
    ai = a[:, f_pad:]
    inv = pl.reciprocal(jnp.sqrt(ar * ar + ai * ai) + 1e-16, approx=True)
    ang_ref[:, :f_pad] = ar * inv
    ang_ref[:, f_pad:] = ai * inv


# ---------------------------------------------------------------- call sites --

def istft_frames_call(ang, spec2, dinv, window_row, tile_bt):
    bt_pad, two_f = ang.shape
    n_fft = dinv.shape[1]
    grid = (bt_pad // tile_bt,)
    cost = pl.CostEstimate(
        flops=2 * bt_pad * two_f * n_fft + 3 * bt_pad * n_fft,
        transcendentals=0,
        bytes_accessed=4 * (2 * ang.size + bt_pad * n_fft) + 2 * dinv.size)
    return pl.pallas_call(
        _istft_frames_kernel,
        out_shape=jax.ShapeDtypeStruct((bt_pad, n_fft), jnp.float32),
        grid=grid,
        in_specs=[pl.BlockSpec((tile_bt, two_f), lambda i: (i, 0)),
                  pl.BlockSpec((tile_bt, two_f), lambda i: (i, 0)),
                  pl.BlockSpec((two_f, n_fft), lambda i: (0, 0)),   # VMEM-resident
                  pl.BlockSpec((1, n_fft), lambda i: (0, 0))],
        out_specs=pl.BlockSpec((tile_bt, n_fft), lambda i: (i, 0)),
        compiler_params=pltpu.CompilerParams(
            dimension_semantics=("parallel",),
            vmem_limit_bytes=_VMEM_LIMIT),
        cost_estimate=cost,
    )(ang, spec2, dinv, window_row)


def stft_update_call(frames, window_row, dfwd, tprev, momentum, tile_bt):
    bt_pad, n_fft = frames.shape
    two_f = dfwd.shape[1]
    f_pad = two_f // 2
    grid = (bt_pad // tile_bt,)
    kern = functools.partial(_stft_update_kernel,
                             momentum=float(momentum), f_pad=f_pad)
    out = jax.ShapeDtypeStruct((bt_pad, two_f), jnp.float32)
    cost = pl.CostEstimate(
        flops=2 * bt_pad * n_fft * two_f + 8 * bt_pad * two_f,
        transcendentals=2 * bt_pad * f_pad,
        bytes_accessed=4 * (frames.size + 3 * bt_pad * two_f) + 2 * dfwd.size)
    return pl.pallas_call(
        kern,
        out_shape=(out, out),
        grid=grid,
        in_specs=[pl.BlockSpec((tile_bt, n_fft), lambda i: (i, 0)),
                  pl.BlockSpec((1, n_fft), lambda i: (0, 0)),
                  pl.BlockSpec((n_fft, two_f), lambda i: (0, 0)),   # VMEM-resident
                  pl.BlockSpec((tile_bt, two_f), lambda i: (i, 0))],
        out_specs=(pl.BlockSpec((tile_bt, two_f), lambda i: (i, 0)),
                   pl.BlockSpec((tile_bt, two_f), lambda i: (i, 0))),
        input_output_aliases={3: 0},   # tprev HBM buffer reused for `rebuilt`
        compiler_params=pltpu.CompilerParams(
            dimension_semantics=("parallel",),
            vmem_limit_bytes=_VMEM_LIMIT),
        cost_estimate=cost,
    )(frames, window_row, dfwd, tprev)


# ------------------------------------------------------------------- module --

class PhaseRecoveryPallas:
    """Mirrors PhaseRecovery.forward (griffinlim path, n_dm_iter == 0)."""

    def __init__(self, n_fft=16, n_fgla_iter=4, n_dm_iter=0, win_length=None,
                 hop_length=None, momentum=0.99, length=None, rand_init=True,
                 beta=1.0, stereo=True, stereo_coherence=0.67,
                 mxu_dtype=jnp.bfloat16):
        if not 0 <= momentum < 1:
            raise ValueError("momentum must be in [0, 1)")
        # TODO(synk): difference_map (n_dm_iter > 0) path not implemented; module default is 0.
        assert n_dm_iter == 0
        self.n_fft = n_fft
        self.n_fgla_iter = n_fgla_iter
        self.win_length = win_length if win_length is not None else n_fft
        self.hop_length = hop_length if hop_length is not None else self.win_length // 2
        assert self.win_length == n_fft, "win_length < n_fft padding not implemented"
        self.momentum = momentum
        self.length = length
        self.rand_init = rand_init
        self.stereo = stereo
        self.stereo_coherence = stereo_coherence

        N = n_fft
        F = N // 2 + 1
        self.F = F
        F_pad = _round_up(F, 128)                 # lane-dense frequency axis
        self.F_pad = F_pad
        n = np.arange(N)
        k = np.arange(F)
        theta = 2.0 * np.pi * np.outer(n, k) / N  # (N, F)
        fc, fs = np.cos(theta), np.sin(theta)
        # fused forward DFT:  (x*w) @ dfwd -> [Sr | Si]   (zero columns in the pad)
        dfwd = np.zeros((N, 2 * F_pad), np.float32)
        dfwd[:, :F] = fc
        dfwd[:, F_pad:F_pad + F] = -fs
        # fused inverse onesided DFT:  [Xr | Xi] @ dinv -> frames (zero padded rows)
        c = np.full((F,), 2.0)
        c[0] = 1.0
        if N % 2 == 0:
            c[-1] = 1.0
        dinv = np.zeros((2 * F_pad, N), np.float32)
        dinv[:F, :] = (c[:, None] * fc.T) / N
        dinv[F_pad:F_pad + F, :] = (-c[:, None] * fs.T) / N
        self.dfwd = jnp.asarray(dfwd, mxu_dtype)
        self.dinv = jnp.asarray(dinv, mxu_dtype)
        # periodic Hann window (torch.hann_window default)
        w = 0.5 - 0.5 * np.cos(2.0 * np.pi * np.arange(self.win_length) / self.win_length)
        self.window = jnp.asarray(w, jnp.float32)
        self.window_row = self.window[None, :]

        self._jit_forward = jax.jit(self._forward_impl)

    def __call__(self, specgram, key):
        return self._jit_forward(specgram, key)

    # ---------------------------------------------------------------- forward --

    def _forward_impl(self, specgram, key):
        shape = specgram.shape
        F, T = shape[-2], shape[-1]
        assert F == self.F, "spectrogram freq dim must equal n_fft//2 + 1"
        spec = specgram.reshape((-1, F, T)).astype(jnp.float32)
        B = spec.shape[0]
        n_fft, hop = self.n_fft, self.hop_length
        F_pad = self.F_pad
        pad = n_fft // 2
        L = hop * (T - 1) if self.length is None else self.length
        momentum = self.momentum / (1.0 + self.momentum)

        BT = B * T
        # Row tiling of B*T: large enough to pipeline, bounded by a VMEM budget
        # (re-derived per shape so v7x's smaller 64 MiB VMEM is also safe).
        row_bytes = 8 * (2 * n_fft + 6 * F_pad)            # ~double-buffered f32 tiles
        tile_bt = min(512, (12 * 1024 * 1024) // row_bytes)
        tile_bt = max(8, (tile_bt // 8) * 8)
        tile_bt = min(tile_bt, _round_up(BT, 8))
        BT_pad = _round_up(BT, tile_bt)

        use_half = (2 * hop == n_fft) and (self.length is None)

        def to_rows(x):                    # (B, F, T) -> (BT_pad, F_pad), zero padded
            r = jnp.transpose(x, (0, 2, 1)).reshape(BT, F)
            return jnp.pad(r, ((0, BT_pad - BT), (0, F_pad - F)))

        # loop-invariant layout transforms hoisted out of the Griffin-Lim loop
        spec2 = jnp.concatenate([to_rows(spec)] * 2, axis=-1)        # (BT_pad, 2F_pad)
        if self.stereo:
            merged = jnp.repeat((spec[0::2] + spec[1::2]) / 2.0, 2, axis=0)
            merged2 = jnp.concatenate([to_rows(merged)] * 2, axis=-1)

        # angle init (complex CN(0,1) broadcast over batch, as in torch.randn)
        if self.rand_init:
            k1, k2 = jax.random.split(key)
            ar0 = jax.random.normal(k1, (1, F, T), jnp.float32) / math.sqrt(2.0)
            ai0 = jax.random.normal(k2, (1, F, T), jnp.float32) / math.sqrt(2.0)
        else:
            ar0 = jnp.ones((1, F, T), jnp.float32)
            ai0 = jnp.zeros((1, F, T), jnp.float32)
        ang = jnp.concatenate([to_rows(jnp.broadcast_to(ar0, (B, F, T))),
                               to_rows(jnp.broadcast_to(ai0, (B, F, T)))], axis=-1)

        # framing / overlap-add: reshape + shift-add for 50% overlap, else fallback
        if use_half:
            def ola(frames):
                Bf = frames.shape[0]
                h0, h1 = frames[:, :, :hop], frames[:, :, hop:]
                z = jnp.zeros((Bf, 1, hop), frames.dtype)
                y = jnp.concatenate([h0, z], 1) + jnp.concatenate([z, h1], 1)
                return y.reshape(Bf, hop * (T + 1))

            def frame(x_pad):
                segs = x_pad.reshape(B, T + 1, hop)
                return jnp.concatenate([segs[:, :T], segs[:, 1:T + 1]], axis=-1)
        else:
            # TODO(synk): general hop path keeps XLA gather/scatter; only the default
            # 50%-overlap (hop == n_fft//2, length=None) case is specialized.
            fidx = jnp.arange(T)[:, None] * hop + jnp.arange(n_fft)[None, :]

            def ola(frames):
                Bf = frames.shape[0]
                l_full = hop * (T - 1) + n_fft
                y = jnp.zeros((Bf, l_full), frames.dtype)
                return y.at[:, fidx.reshape(-1)].add(frames.reshape(Bf, -1))

            def frame(x_pad):
                return x_pad[:, fidx]

        # window^2 overlap envelope (ISTFT normalization), computed once
        wsq = jnp.broadcast_to((self.window ** 2)[None, None, :], (1, T, n_fft))
        env = ola(wsq)[0]
        env_safe = jnp.where(env > 1e-11, env, 1.0)

        def istft(ang_rows, spec2_rows):
            fr = istft_frames_call(ang_rows, spec2_rows, self.dinv,
                                   self.window_row, tile_bt)
            fr = fr[:BT].reshape(B, T, n_fft)
            y = ola(fr) / env_safe[None, :]
            return y[:, pad:pad + L]

        tprev = jnp.zeros((BT_pad, 2 * F_pad), jnp.float32)

        n_iter = self.n_fgla_iter
        for i in range(n_iter):
            if self.stereo:
                t = max(i / n_iter - self.stereo_coherence, 0.0)
                interp2 = spec2 * t + merged2 * (1.0 - t)
            else:
                interp2 = spec2
            inverse = istft(ang, interp2)                              # (B, L)
            xp = jnp.pad(inverse, ((0, 0), (pad, pad)), mode="reflect")
            fr = frame(xp).reshape(BT, n_fft)
            fr = jnp.pad(fr, ((0, BT_pad - BT), (0, 0)))
            reb, ang = stft_update_call(fr, self.window_row, self.dfwd,
                                        tprev, momentum, tile_bt)
            tprev = reb

        waveform = istft(ang, spec2)                                   # (B, L)
        return waveform.reshape(shape[:-2] + (L,))


# --------------------------------------------------------------------- main --

if __name__ == "__main__":
    key = jax.random.PRNGKey(0)
    n_fft, hop, T = 16, 8, 8
    F = n_fft // 2 + 1
    k_spec, k_init = jax.random.split(key)

    # magnitude spectrogram, shape (..., freq, time) — stereo pair: (2, 9, 8)
    specgram = jnp.abs(jax.random.normal(k_spec, (2, F, T), jnp.float32))

    model = PhaseRecoveryPallas(n_fft=n_fft, n_fgla_iter=4, hop_length=hop,
                                momentum=0.99, rand_init=True,
                                stereo=True, stereo_coherence=0.67)
    wave = model(specgram, k_init)
    wave = jax.block_until_ready(wave)

    assert wave.shape == (2, hop * (T - 1)), wave.shape
    assert bool(jnp.all(jnp.isfinite(wave)))
    print("KERNEL_OK")
</pallas_src>

<mosaic_0001>
module attributes {stable_mosaic.version = 11 : i64} {
  func.func @_istft_frames_kernel(%arg0: i32, %arg1: memref<16x256xf32, #tpu.memory_space<vmem>>, %arg2: memref<16x256xf32, #tpu.memory_space<vmem>>, %arg3: memref<256x16xbf16, #tpu.memory_space<vmem>>, %arg4: memref<1x16xf32, #tpu.memory_space<vmem>>, %arg5: memref<16x16xf32, #tpu.memory_space<vmem>>) attributes {dimension_semantics = [#tpu.dimension_semantics<parallel>], iteration_bounds = array<i64: 1>, scalar_prefetch = 0 : i64, scratch_operands = 0 : i64, tpu.core_type = #tpu.core_type<tc>, window_params = [{transform_indices = @transform_0, window_bounds = array<i64: 16, 256>}, {transform_indices = @transform_1, window_bounds = array<i64: 16, 256>}, {pipeline_mode = #tpu.pipeline_mode<synchronous>, transform_indices = @transform_2, window_bounds = array<i64: 256, 16>}, {pipeline_mode = #tpu.pipeline_mode<synchronous>, transform_indices = @transform_3, window_bounds = array<i64: 1, 16>}, {transform_indices = @transform_4, window_bounds = array<i64: 16, 16>}]} {
    %c0 = arith.constant 0 : index
    %c0_0 = arith.constant 0 : index
    %0 = vector.load %arg1[%c0, %c0_0] : memref<16x256xf32, #tpu.memory_space<vmem>>, vector<16x256xf32>
    %c0_1 = arith.constant 0 : index
    %c0_2 = arith.constant 0 : index
    %1 = vector.load %arg2[%c0_1, %c0_2] : memref<16x256xf32, #tpu.memory_space<vmem>>, vector<16x256xf32>
    %2 = arith.mulf %0, %1 : vector<16x256xf32>
    %3 = arith.truncf %2 : vector<16x256xf32> to vector<16x256xbf16>
    %c0_3 = arith.constant 0 : index
    %c0_4 = arith.constant 0 : index
    %4 = vector.load %arg3[%c0_3, %c0_4] : memref<256x16xbf16, #tpu.memory_space<vmem>>, vector<256x16xbf16>
    %cst = arith.constant dense<0.000000e+00> : vector<16x16xf32>
    %5 = tpu.matmul %3, %4, %cst {dimension_numbers = #tpu.dot_dimension_numbers<[1], [0], [0], [1], [0, 0, 1, 1], [], []>} : vector<16x256xbf16>, vector<256x16xbf16>, vector<16x16xf32> -> vector<16x16xf32>
    %c0_5 = arith.constant 0 : index
    %c0_6 = arith.constant 0 : index
    %6 = vector.load %arg4[%c0_5, %c0_6] : memref<1x16xf32, #tpu.memory_space<vmem>>, vector<1x16xf32>
    %7 = vector.broadcast %6 : vector<1x16xf32> to vector<16x16xf32>
    %8 = arith.mulf %5, %7 : vector<16x16xf32>
    %c0_7 = arith.constant 0 : index
    %c0_8 = arith.constant 0 : index
    %9 = vector.load %arg5[%c0_7, %c0_8] : memref<16x16xf32, #tpu.memory_space<vmem>>, vector<16x16xf32>
    tpu.vector_store %arg5[%c0_7, %c0_8], %8 {strides = array<i32>} : memref<16x16xf32, #tpu.memory_space<vmem>>, vector<16x16xf32>,
    return
  }
  func.func @transform_0(%arg0: i32) -> (i32, i32) {
    %c0_i32 = arith.constant 0 : i32
    %c0_i32_0 = arith.constant 0 : i32
    return %arg0, %c0_i32 : i32, i32
  }
  func.func @transform_1(%arg0: i32) -> (i32, i32) {
    %c0_i32 = arith.constant 0 : i32
    %c0_i32_0 = arith.constant 0 : i32
    return %arg0, %c0_i32 : i32, i32
  }
  func.func @transform_2(%arg0: i32) -> (i32, i32) {
    %c0_i32 = arith.constant 0 : i32
    %c0_i32_0 = arith.constant 0 : i32
    %c0_i32_1 = arith.constant 0 : i32
    return %c0_i32, %c0_i32_0 : i32, i32
  }
  func.func @transform_3(%arg0: i32) -> (i32, i32) {
    %c0_i32 = arith.constant 0 : i32
    %c0_i32_0 = arith.constant 0 : i32
    %c0_i32_1 = arith.constant 0 : i32
    return %c0_i32, %c0_i32_0 : i32, i32
  }
  func.func @transform_4(%arg0: i32) -> (i32, i32) {
    %c0_i32 = arith.constant 0 : i32
    %c0_i32_0 = arith.constant 0 : i32
    return %arg0, %c0_i32 : i32, i32
  }
}

module attributes {stable_mosaic.version = 11 : i64} {
  func.func @_stft_update_kernel(%arg0: i32, %arg1: memref<16x16xf32, #tpu.memory_space<vmem>>, %arg2: memref<1x16xf32, #tpu.memory_space<vmem>>, %arg3: memref<16x256xbf16, #tpu.memory_space<vmem>>, %arg4: memref<16x256xf32, #tpu.memory_space<vmem>>, %arg5: memref<16x256xf32, #tpu.memory_space<vmem>>, %arg6: memref<16x256xf32, #tpu.memory_space<vmem>>) attributes {dimension_semantics = [#tpu.dimension_semantics<parallel>], iteration_bounds = array<i64: 1>, scalar_prefetch = 0 : i64, scratch_operands = 0 : i64, tpu.core_type = #tpu.core_type<tc>, window_params = [{transform_indices = @transform_0, window_bounds = array<i64: 16, 16>}, {pipeline_mode = #tpu.pipeline_mode<synchronous>, transform_indices = @transform_1, window_bounds = array<i64: 1, 16>}, {pipeline_mode = #tpu.pipeline_mode<synchronous>, transform_indices = @transform_2, window_bounds = array<i64: 16, 256>}, {transform_indices = @transform_3, window_bounds = array<i64: 16, 256>}, {transform_indices = @transform_4, window_bounds = array<i64: 16, 256>}, {transform_indices = @transform_5, window_bounds = array<i64: 16, 256>}]} {
    %c0 = arith.constant 0 : index
    %c0_0 = arith.constant 0 : index
    %0 = vector.load %arg1[%c0, %c0_0] : memref<16x16xf32, #tpu.memory_space<vmem>>, vector<16x16xf32>
    %c0_1 = arith.constant 0 : index
    %c0_2 = arith.constant 0 : index
    %1 = vector.load %arg2[%c0_1, %c0_2] : memref<1x16xf32, #tpu.memory_space<vmem>>, vector<1x16xf32>
    %2 = vector.broadcast %1 : vector<1x16xf32> to vector<16x16xf32>
    %3 = arith.mulf %0, %2 : vector<16x16xf32>
    %4 = arith.truncf %3 : vector<16x16xf32> to vector<16x16xbf16>
    %c0_3 = arith.constant 0 : index
    %c0_4 = arith.constant 0 : index
    %5 = vector.load %arg3[%c0_3, %c0_4] : memref<16x256xbf16, #tpu.memory_space<vmem>>, vector<16x256xbf16>
    %cst = arith.constant dense<0.000000e+00> : vector<16x256xf32>
    %6 = tpu.matmul %4, %5, %cst {dimension_numbers = #tpu.dot_dimension_numbers<[1], [0], [0], [1], [0, 0, 1, 1], [], []>} : vector<16x16xbf16>, vector<16x256xbf16>, vector<16x256xf32> -> vector<16x256xf32>
    %c0_5 = arith.constant 0 : index
    %c0_6 = arith.constant 0 : index
    %7 = vector.load %arg5[%c0_5, %c0_6] : memref<16x256xf32, #tpu.memory_space<vmem>>, vector<16x256xf32>
    tpu.vector_store %arg5[%c0_5, %c0_6], %6 {strides = array<i32>} : memref<16x256xf32, #tpu.memory_space<vmem>>, vector<16x256xf32>,
    %c0_7 = arith.constant 0 : index
    %c0_8 = arith.constant 0 : index
    %8 = vector.load %arg4[%c0_7, %c0_8] : memref<16x256xf32, #tpu.memory_space<vmem>>, vector<16x256xf32>
    %cst_9 = arith.constant 0.497487426 : f32
    %9 = vector.broadcast %cst_9 : f32 to vector<16x256xf32>
    %10 = arith.mulf %9, %8 : vector<16x256xf32>
    %11 = arith.subf %6, %10 : vector<16x256xf32>
    %12 = vector.extract_strided_slice %11 {offsets = [0, 0], sizes = [16, 128], strides = [1, 1]} : vector<16x256xf32> to vector<16x128xf32>
    %13 = vector.extract_strided_slice %11 {offsets = [0, 128], sizes = [16, 128], strides = [1, 1]} : vector<16x256xf32> to vector<16x128xf32>
    %14 = arith.mulf %12, %12 : vector<16x128xf32>
    %15 = arith.mulf %13, %13 : vector<16x128xf32>
    %16 = arith.addf %14, %15 : vector<16x128xf32>
    %17 = math.sqrt %16 : vector<16x128xf32>
    %cst_10 = arith.constant 1.000000e-16 : f32
    %18 = vector.broadcast %cst_10 : f32 to vector<16x128xf32>
    %19 = arith.addf %17, %18 : vector<16x128xf32>
    %20 = tpu.reciprocal %19 {approx = true} : vector<16x128xf32> -> vector<16x128xf32>
    %21 = arith.mulf %12, %20 : vector<16x128xf32>
    %c0_11 = arith.constant 0 : index
    %c0_12 = arith.constant 0 : index
    %22 = vector.load %arg6[%c0_11, %c0_12] : memref<16x256xf32, #tpu.memory_space<vmem>>, vector<16x128xf32>
    tpu.vector_store %arg6[%c0_11, %c0_12], %21 {strides = array<i32>} : memref<16x256xf32, #tpu.memory_space<vmem>>, vector<16x128xf32>,
    %23 = arith.mulf %13, %20 : vector<16x128xf32>
    %c0_13 = arith.constant 0 : index
    %c128 = arith.constant 128 : index
    %24 = vector.load %arg6[%c0_13, %c128] : memref<16x256xf32, #tpu.memory_space<vmem>>, vector<16x128xf32>
    tpu.vector_store %arg6[%c0_13, %c128], %23 {strides = array<i32>} : memref<16x256xf32, #tpu.memory_space<vmem>>, vector<16x128xf32>,
    return
  }
  func.func @transform_0(%arg0: i32) -> (i32, i32) {
    %c0_i32 = arith.constant 0 : i32
    %c0_i32_0 = arith.constant 0 : i32
    return %arg0, %c0_i32 : i32, i32
  }
  func.func @transform_1(%arg0: i32) -> (i32, i32) {
    %c0_i32 = arith.constant 0 : i32
    %c0_i32_0 = arith.constant 0 : i32
    %c0_i32_1 = arith.constant 0 : i32
    return %c0_i32, %c0_i32_0 : i32, i32
  }
  func.func @transform_2(%arg0: i32) -> (i32, i32) {
    %c0_i32 = arith.constant 0 : i32
    %c0_i32_0 = arith.constant 0 : i32
    %c0_i32_1 = arith.constant 0 : i32
    return %c0_i32, %c0_i32_0 : i32, i32
  }
  func.func @transform_3(%arg0: i32) -> (i32, i32) {
    %c0_i32 = arith.constant 0 : i32
    %c0_i32_0 = arith.constant 0 : i32
    return %arg0, %c0_i32 : i32, i32
  }
  func.func @transform_4(%arg0: i32) -> (i32, i32) {
    %c0_i32 = arith.constant 0 : i32
    %c0_i32_0 = arith.constant 0 : i32
    return %arg0, %c0_i32 : i32, i32
  }
  func.func @transform_5(%arg0: i32) -> (i32, i32) {
    %c0_i32 = arith.constant 0 : i32
    %c0_i32_0 = arith.constant 0 : i32
    return %arg0, %c0_i32 : i32, i32
  }
}

</mosaic_0001>

<llo_original>
// kernel: _forward_impl.10
$region0: #{_forward_impl.10}
  #allocation0 [shape = 'u32[]', space=smem, size = 0x4, offset = 0x4, fixed_abs, tag = 'smem constant byte address 0x4 - core index']
  #allocation1 [shape = 'u32[144,128]{1,0:T(1,128)}', space=vmem, size = 0x12000, scoped, tag = 'internal scratch']
  %s0 = inlined_call_operand.vmem [shape: f32[16,16], index: 0, kind: input, shape index: {}]
  %s1 = inlined_call_operand.vmem [shape: f32[1,16], index: 1, kind: input, shape index: {}]
  %s2 = inlined_call_operand.vmem [shape: bf16[16,256], index: 2, kind: input, shape index: {}]
  %s3 = inlined_call_operand.vmem [shape: f32[16,256], index: 3, kind: input, shape index: {}, may-alias: {3,4}]
  %s4 = inlined_call_operand.vmem [shape: f32[16,256], index: 4, kind: output, shape index: {0}, may-alias: {3,4}]
  %s5 = inlined_call_operand.vmem [shape: f32[16,256], index: 5, kind: output, shape index: {1}]
  %6 = xla_tuple %s4, %s5
  %s7 = sld [smem:[#allocation0]]
  $region34: #{_forward_impl.10} parent=0
    _
  %s9 = ssub.s32 1, %s7
  %s10 = scalar_select 0, %s9, %s7
  // Predicated region
  $region2: #{_forward_impl.10} parent=0 // pred_check
    _
  $region3: #{_forward_impl.10} parent=0 // pred_check_branch
    %12 = sbr.rel (0) target = $region5
  $region4: #{_forward_impl.10} parent=0 // pred_region
    _
  $region5: #{_forward_impl.10} parent=0 // pred_fallthru
    _
  // Predicated region
  $region6: #{_forward_impl.10} parent=0 // pred_check
    _
  $region7: #{_forward_impl.10} parent=0 // pred_check_branch
    %14 = sbr.rel (0) target = $region9
  $region8: #{_forward_impl.10} parent=0 // pred_region
    _
  $region9: #{_forward_impl.10} parent=0 // pred_fallthru
    _
  // Predicated region
  $region10: #{_forward_impl.10} parent=0 // pred_check
    _
  $region11: #{_forward_impl.10} parent=0 // pred_check_branch
    %16 = sbr.rel (0) target = $region13
  $region12: #{_forward_impl.10} parent=0 // pred_region
    _
  $region13: #{_forward_impl.10} parent=0 // pred_fallthru
    _
  // Predicated region
  $region14: #{_forward_impl.10} parent=0 // pred_check
    _
  $region15: #{_forward_impl.10} parent=0 // pred_check_branch
    %18 = sbr.rel (0) target = $region17
  $region16: #{_forward_impl.10} parent=0 // pred_region
    _
  $region17: #{_forward_impl.10} parent=0 // pred_fallthru
    _
  %v20 = vld [vmem:[%s0] sm:$0xff]
  %v21 = vld [vmem:[%s0 + $0x8] sm:$0xff]
  %v22 = vld [vmem:[%s1] sm:$0x1]
  %v24 = vlaneseq
  %v25 = vshrl.u32 %v24, 7
  %v26 = vsub.s32 0, %v25
  %v27 = vrot.slane %v22, %v26
  %v29 = vmul.f32 %v20, %v27
  %v30 = vmul.f32 %v21, %v27
  %v31 = vpack.c.bf16 %v30, %v29
  %v32 = vld [vmem:[%s2] sm:$0xff]
  %v33 = vld [vmem:[%s2 + $0x8] sm:$0xff]
  %v36 = vunpack.c.l.b16 %v32
  %v37 = vunpack.c.h.b16 %v32
  %v38 = vunpack.c.l.b16 %v33
  %v39 = vunpack.c.h.b16 %v33
  %v40 = vpack.c.b16 %v38, %v36
  %v41 = vpack.c.b16 %v39, %v37
  %vm44 = vcmask 130048
  %v46 = vsel %vm44, %v31, 0
  %48 = vmatprep.subr.bf16.mxu0 0
  %49 = vmatpush1.bf16.msra.mxu0 0
  %50 = vmatprep.subr.bf16.mxu0 0
  %51 = vmatpush1.bf16.msra.mxu0 0
  %52 = vmatprep.subr.bf16.mxu0 0
  %53 = vmatpush1.bf16.msra.mxu0 0
  %54 = vmatprep.subr.bf16.mxu0 0
  %55 = vmatpush1.bf16.msra.mxu0 0
  %56 = vmatprep.subr.bf16.mxu0 0
  %57 = vmatpush1.bf16.msra.mxu0 0
  %58 = vmatprep.subr.bf16.mxu0 0
  %59 = vmatpush1.bf16.msra.mxu0 0
  %60 = vmatprep.subr.bf16.mxu0 0
  %61 = vmatpush1.bf16.msra.mxu0 0
  %62 = vmatprep.subr.bf16.mxu0 %v41
  %63 = vmatpush1.bf16.msra.mxu0 %v40
  %64 = vmatprep.subr.bf16.mxu0 0
  %65 = vmatpush2.bf16.msra.mxu0 0
  %66 = vmatprep.subr.bf16.mxu0 0
  %67 = vmatpush2.bf16.msra.mxu0 0
  %68 = vmatprep.subr.bf16.mxu0 0
  %69 = vmatpush2.bf16.msra.mxu0 0
  %70 = vmatprep.subr.bf16.mxu0 0
  %71 = vmatpush2.bf16.msra.mxu0 0
  %72 = vmatprep.subr.bf16.mxu0 0
  %73 = vmatpush2.bf16.msra.mxu0 0
  %74 = vmatprep.subr.bf16.mxu0 0
  %75 = vmatpush2.bf16.msra.mxu0 0
  %76 = vmatprep.subr.bf16.mxu0 0
  %77 = vmatpush2.bf16.msra.mxu0 0
  %78 = vmatprep.subr.bf16.mxu0 0
  %79 = vmatpush2.bf16.msra.mxu0 0
  %80 = vmatprep.mubr.bf16.mxu0 0
  %81 = vmatmul.mubr.bf16.gmra.mxu0 %v46
  %v82 = vpop.f32.mrf.mxu0
  %v83 = vadd.f32 0.0, %v82
  %v84 = vpop.f32.mrf.mxu0
  %v85 = vadd.f32 0.0, %v84
  %v86 = vpop.f32.mrf.mxu0
  %v87 = vadd.f32 0.0, %v86
  %v88 = vpop.f32.mrf.mxu0
  %v89 = vadd.f32 0.0, %v88
  %90 = vdwg.mxu0
  %91 = vst [vmem:[%s4] sm:$0xff] %v83
  %92 = vst [vmem:[%s4 + $0x8] sm:$0xff] %v85
  %93 = vst [vmem:[%s4 + $0x10] sm:$0xff] %v87
  %94 = vst [vmem:[%s4 + $0x18] sm:$0xff] %v89
  %v95 = vld [vmem:[%s3] sm:$0xff]
  %v96 = vld [vmem:[%s3 + $0x8] sm:$0xff]
  %v97 = vld [vmem:[%s3 + $0x10] sm:$0xff]
  %v98 = vld [vmem:[%s3 + $0x18] sm:$0xff]
  %v99 = vmul.f32 %v95, 0.49748743
  %v100 = vmul.f32 %v96, 0.49748743
  %v101 = vmul.f32 %v97, 0.49748743
  %v102 = vmul.f32 %v98, 0.49748743
  %v103 = vsub.f32 %v83, %v99
  %v104 = vsub.f32 %v85, %v100
  %v105 = vsub.f32 %v87, %v101
  %v106 = vsub.f32 %v89, %v102
  %v107 = vmul.f32 %v103, %v103
  %v108 = vmul.f32 %v105, %v105
  %v109 = vmul.f32 %v104, %v104
  %v110 = vmul.f32 %v106, %v106
  %v111 = vadd.f32 %v107, %v109
  %v112 = vadd.f32 %v108, %v110
  %v113 = vrsqrt.pop %v111
  %v114 = vmul.f32 %v111, %v113
  %vm115 = vcmp.eq.f32.partialorder %v111, inf
  %v116 = vsel %vm115, %v111, %v114
  %vm117 = vcmp.eq.f32.partialorder %v111, 0.0
  %v118 = vand.u32 %v111, 2147483648
  %v119 = vsel %vm117, %v118, %v116
  %v120 = vrsqrt.pop %v112
  %v121 = vmul.f32 %v112, %v120
  %vm122 = vcmp.eq.f32.partialorder %v112, inf
  %v123 = vsel %vm122, %v112, %v121
  %vm124 = vcmp.eq.f32.partialorder %v112, 0.0
  %v125 = vand.u32 %v112, 2147483648
  %v126 = vsel %vm124, %v125, %v123
  %v127 = vadd.f32 %v119, 1e-16
  %v128 = vadd.f32 %v126, 1e-16
  %v129 = vrcp.pop %v127
  %v130 = vrcp.pop %v128
  %v131 = vmul.f32 %v103, %v129
  %v132 = vmul.f32 %v105, %v130
  %133 = vst [vmem:[%s5] sm:$0xff] %v131
  %134 = vst [vmem:[%s5 + $0x10] sm:$0xff] %v132
  %v135 = vmul.f32 %v104, %v129
  %v136 = vmul.f32 %v106, %v130
  %137 = vst [vmem:[%s5 + $0x8] sm:$0xff] %v135
  %138 = vst [vmem:[%s5 + $0x18] sm:$0xff] %v136
  // Predicated region
  $region18: #{_forward_impl.10} parent=0 // pred_check
    _
  $region19: #{_forward_impl.10} parent=0 // pred_check_branch
    %140 = sbr.rel (0) target = $region21
  $region20: #{_forward_impl.10} parent=0 // pred_region
    _
  $region21: #{_forward_impl.10} parent=0 // pred_fallthru
    _
  // Predicated region
  $region22: #{_forward_impl.10} parent=0 // pred_check
    _
  $region23: #{_forward_impl.10} parent=0 // pred_check_branch
    %142 = sbr.rel (0) target = $region25
  $region24: #{_forward_impl.10} parent=0 // pred_region
    _
  $region25: #{_forward_impl.10} parent=0 // pred_fallthru
    _
  // Predicated region
  $region26: #{_forward_impl.10} parent=0 // pred_check
    _
  $region27: #{_forward_impl.10} parent=0 // pred_check_branch
    %144 = sbr.rel (0) target = $region29
  $region28: #{_forward_impl.10} parent=0 // pred_region
    _
  $region29: #{_forward_impl.10} parent=0 // pred_fallthru
    _
  // Predicated region
  $region30: #{_forward_impl.10} parent=0 // pred_check
    _
  $region31: #{_forward_impl.10} parent=0 // pred_check_branch
    %146 = sbr.rel (0) target = $region33
  $region32: #{_forward_impl.10} parent=0 // pred_region
    _
  $region33: #{_forward_impl.10} parent=0 // pred_fallthru
    _

// kernel: _forward_impl.9
$region0: #{_forward_impl.9}
  #allocation0 [shape = 'u32[]', space=smem, size = 0x4, offset = 0x4, fixed_abs, tag = 'smem constant byte address 0x4 - core index']
  #allocation1 [shape = 'u32[144,128]{1,0:T(1,128)}', space=vmem, size = 0x12000, scoped, tag = 'internal scratch']
  %s0 = inlined_call_operand.vmem [shape: f32[16,256], index: 0, kind: input, shape index: {}]
  %s1 = inlined_call_operand.vmem [shape: f32[16,256], index: 1, kind: input, shape index: {}]
  %s2 = inlined_call_operand.vmem [shape: bf16[256,16], index: 2, kind: input, shape index: {}]
  %s3 = inlined_call_operand.vmem [shape: f32[1,16], index: 3, kind: input, shape index: {}]
  %s4 = inlined_call_operand.vmem [shape: f32[16,16], index: 4, kind: output, shape index: {}]
  %s5 = sld [smem:[#allocation0]]
  $region26: #{_forward_impl.9} parent=0
    _
  %s7 = ssub.s32 1, %s5
  %s8 = scalar_select 0, %s7, %s5
  // Predicated region
  $region2: #{_forward_impl.9} parent=0 // pred_check
    _
  $region3: #{_forward_impl.9} parent=0 // pred_check_branch
    %10 = sbr.rel (0) target = $region5
  $region4: #{_forward_impl.9} parent=0 // pred_region
    _
  $region5: #{_forward_impl.9} parent=0 // pred_fallthru
    _
  // Predicated region
  $region6: #{_forward_impl.9} parent=0 // pred_check
    _
  $region7: #{_forward_impl.9} parent=0 // pred_check_branch
    %12 = sbr.rel (0) target = $region9
  $region8: #{_forward_impl.9} parent=0 // pred_region
    _
  $region9: #{_forward_impl.9} parent=0 // pred_fallthru
    _
  // Predicated region
  $region10: #{_forward_impl.9} parent=0 // pred_check
    _
  $region11: #{_forward_impl.9} parent=0 // pred_check_branch
    %14 = sbr.rel (0) target = $region13
  $region12: #{_forward_impl.9} parent=0 // pred_region
    _
  $region13: #{_forward_impl.9} parent=0 // pred_fallthru
    _
  // Predicated region
  $region14: #{_forward_impl.9} parent=0 // pred_check
    _
  $region15: #{_forward_impl.9} parent=0 // pred_check_branch
    %16 = sbr.rel (0) target = $region17
  $region16: #{_forward_impl.9} parent=0 // pred_region
    _
  $region17: #{_forward_impl.9} parent=0 // pred_fallthru
    _
  %v18 = vld [vmem:[%s0] sm:$0xff]
  %v19 = vld [vmem:[%s0 + $0x8] sm:$0xff]
  %v20 = vld [vmem:[%s0 + $0x10] sm:$0xff]
  %v21 = vld [vmem:[%s0 + $0x18] sm:$0xff]
  %v22 = vld [vmem:[%s1] sm:$0xff]
  %v23 = vld [vmem:[%s1 + $0x8] sm:$0xff]
  %v24 = vld [vmem:[%s1 + $0x10] sm:$0xff]
  %v25 = vld [vmem:[%s1 + $0x18] sm:$0xff]
  %v26 = vmul.f32 %v18, %v22
  %v27 = vmul.f32 %v19, %v23
  %v28 = vmul.f32 %v20, %v24
  %v29 = vmul.f32 %v21, %v25
  %v30 = vpack.c.bf16 %v28, %v26
  %v31 = vpack.c.bf16 %v29, %v27
  %v32 = vld [vmem:[%s2] sm:$0xf]
  %v33 = vld [vmem:[%s2 + $0x4] sm:$0xf]
  %v34 = vld [vmem:[%s2 + $0x8] sm:$0xf]
  %v35 = vld [vmem:[%s2 + $0xc] sm:$0xf]
  %v36 = vld [vmem:[%s2 + $0x10] sm:$0xf]
  %v37 = vld [vmem:[%s2 + $0x14] sm:$0xf]
  %v38 = vld [vmem:[%s2 + $0x18] sm:$0xf]
  %v39 = vld [vmem:[%s2 + $0x1c] sm:$0xf]
  %v40 = vld [vmem:[%s2 + $0x20] sm:$0xf]
  %v41 = vld [vmem:[%s2 + $0x24] sm:$0xf]
  %v42 = vld [vmem:[%s2 + $0x28] sm:$0xf]
  %v43 = vld [vmem:[%s2 + $0x2c] sm:$0xf]
  %v44 = vld [vmem:[%s2 + $0x30] sm:$0xf]
  %v45 = vld [vmem:[%s2 + $0x34] sm:$0xf]
  %v46 = vld [vmem:[%s2 + $0x38] sm:$0xf]
  %v47 = vld [vmem:[%s2 + $0x3c] sm:$0xf]
  %v48 = vld [vmem:[%s2 + $0x40] sm:$0xf]
  %v49 = vld [vmem:[%s2 + $0x44] sm:$0xf]
  %v50 = vld [vmem:[%s2 + $0x48] sm:$0xf]
  %v51 = vld [vmem:[%s2 + $0x4c] sm:$0xf]
  %v52 = vld [vmem:[%s2 + $0x50] sm:$0xf]
  %v53 = vld [vmem:[%s2 + $0x54] sm:$0xf]
  %v54 = vld [vmem:[%s2 + $0x58] sm:$0xf]
  %v55 = vld [vmem:[%s2 + $0x5c] sm:$0xf]
  %v56 = vld [vmem:[%s2 + $0x60] sm:$0xf]
  %v57 = vld [vmem:[%s2 + $0x64] sm:$0xf]
  %v58 = vld [vmem:[%s2 + $0x68] sm:$0xf]
  %v59 = vld [vmem:[%s2 + $0x6c] sm:$0xf]
  %v60 = vld [vmem:[%s2 + $0x70] sm:$0xf]
  %v61 = vld [vmem:[%s2 + $0x74] sm:$0xf]
  %v62 = vld [vmem:[%s2 + $0x78] sm:$0xf]
  %v63 = vld [vmem:[%s2 + $0x7c] sm:$0xf]
  %v96 = vunpack.c.l.b16 %v32
  %v97 = vunpack.c.l.b16 %v33
  %v98 = vunpack.c.l.b16 %v34
  %v99 = vunpack.c.l.b16 %v35
  %v100 = vunpack.c.l.b16 %v36
  %v101 = vunpack.c.l.b16 %v37
  %v102 = vunpack.c.l.b16 %v38
  %v103 = vunpack.c.l.b16 %v39
  %v104 = vunpack.c.l.b16 %v40
  %v105 = vunpack.c.l.b16 %v41
  %v106 = vunpack.c.l.b16 %v42
  %v107 = vunpack.c.l.b16 %v43
  %v108 = vunpack.c.l.b16 %v44
  %v109 = vunpack.c.l.b16 %v45
  %v110 = vunpack.c.l.b16 %v46
  %v111 = vunpack.c.l.b16 %v47
  %v112 = vunpack.c.l.b16 %v48
  %v113 = vunpack.c.l.b16 %v49
  %v114 = vunpack.c.l.b16 %v50
  %v115 = vunpack.c.l.b16 %v51
  %v116 = vunpack.c.l.b16 %v52
  %v117 = vunpack.c.l.b16 %v53
  %v118 = vunpack.c.l.b16 %v54
  %v119 = vunpack.c.l.b16 %v55
  %v120 = vunpack.c.l.b16 %v56
  %v121 = vunpack.c.l.b16 %v57
  %v122 = vunpack.c.l.b16 %v58
  %v123 = vunpack.c.l.b16 %v59
  %v124 = vunpack.c.l.b16 %v60
  %v125 = vunpack.c.l.b16 %v61
  %v126 = vunpack.c.l.b16 %v62
  %v127 = vunpack.c.l.b16 %v63
  %v128 = vpack.c.b16 %v97, %v96
  %v129 = vpack.c.b16 %v99, %v98
  %v130 = vpack.c.b16 %v101, %v100
  %v131 = vpack.c.b16 %v103, %v102
  %v132 = vpack.c.b16 %v105, %v104
  %v133 = vpack.c.b16 %v107, %v106
  %v134 = vpack.c.b16 %v109, %v108
  %v135 = vpack.c.b16 %v111, %v110
  %v136 = vpack.c.b16 %v113, %v112
  %v137 = vpack.c.b16 %v115, %v114
  %v138 = vpack.c.b16 %v117, %v116
  %v139 = vpack.c.b16 %v119, %v118
  %v140 = vpack.c.b16 %v121, %v120
  %v141 = vpack.c.b16 %v123, %v122
  %v142 = vpack.c.b16 %v125, %v124
  %v143 = vpack.c.b16 %v127, %v126
  %160 = vmatprep.subr.bf16.mxu0 0
  %161 = vmatpush1.bf16.msra.mxu0 %v135
  %162 = vmatprep.subr.bf16.mxu0 0
  %163 = vmatpush1.bf16.msra.mxu0 %v134
  %164 = vmatprep.subr.bf16.mxu0 0
  %165 = vmatpush1.bf16.msra.mxu0 %v133
  %166 = vmatprep.subr.bf16.mxu0 0
  %167 = vmatpush1.bf16.msra.mxu0 %v132
  %168 = vmatprep.subr.bf16.mxu0 0
  %169 = vmatpush1.bf16.msra.mxu0 %v131
  %170 = vmatprep.subr.bf16.mxu0 0
  %171 = vmatpush1.bf16.msra.mxu0 %v130
  %172 = vmatprep.subr.bf16.mxu0 0
  %173 = vmatpush1.bf16.msra.mxu0 %v129
  %174 = vmatprep.subr.bf16.mxu0 0
  %175 = vmatpush1.bf16.msra.mxu0 %v128
  %176 = vmatprep.subr.bf16.mxu0 0
  %177 = vmatpush2.bf16.msra.mxu0 %v143
  %178 = vmatprep.subr.bf16.mxu0 0
  %179 = vmatpush2.bf16.msra.mxu0 %v142
  %180 = vmatprep.subr.bf16.mxu0 0
  %181 = vmatpush2.bf16.msra.mxu0 %v141
  %182 = vmatprep.subr.bf16.mxu0 0
  %183 = vmatpush2.bf16.msra.mxu0 %v140
  %184 = vmatprep.subr.bf16.mxu0 0
  %185 = vmatpush2.bf16.msra.mxu0 %v139
  %186 = vmatprep.subr.bf16.mxu0 0
  %187 = vmatpush2.bf16.msra.mxu0 %v138
  %188 = vmatprep.subr.bf16.mxu0 0
  %189 = vmatpush2.bf16.msra.mxu0 %v137
  %190 = vmatprep.subr.bf16.mxu0 0
  %191 = vmatpush2.bf16.msra.mxu0 %v136
  %192 = vmatprep.mubr.bf16.mxu0 %v31
  %193 = vmatmul.mubr.bf16.gmra.mxu0 %v30
  %v194 = vpop.f32.mrf.mxu0
  %v195 = vadd.f32 0.0, %v194
  %v196 = vpop.f32.mrf.mxu0
  %v197 = vpop.f32.mrf.mxu0
  %v198 = vadd.f32 0.0, %v197
  %v199 = vpop.f32.mrf.mxu0
  %200 = vdwg.mxu0
  %v201 = vld [vmem:[%s3] sm:$0x1]
  %v203 = vlaneseq
  %v204 = vshrl.u32 %v203, 7
  %v205 = vsub.s32 0, %v204
  %v206 = vrot.slane %v201, %v205
  %v208 = vmul.f32 %v195, %v206
  %v209 = vmul.f32 %v198, %v206
  %vm210 = vcmask 130048
  %211 = vst.msk [vmem:[%s4] sm:$0xff] %vm210, %v208
  %212 = vst.msk [vmem:[%s4 + $0x8] sm:$0xff] %vm210, %v209
  // Predicated region
  $region18: #{_forward_impl.9} parent=0 // pred_check
    _
  $region19: #{_forward_impl.9} parent=0 // pred_check_branch
    %214 = sbr.rel (0) target = $region21
  $region20: #{_forward_impl.9} parent=0 // pred_region
    _
  $region21: #{_forward_impl.9} parent=0 // pred_fallthru
    _
  // Predicated region
  $region22: #{_forward_impl.9} parent=0 // pred_check
    _
  $region23: #{_forward_impl.9} parent=0 // pred_check_branch
    %216 = sbr.rel (0) target = $region25
  $region24: #{_forward_impl.9} parent=0 // pred_region
    _
  $region25: #{_forward_impl.9} parent=0 // pred_fallthru
    _

</llo_original>
